<compile_context>
chip_gen: v5e
topology: v5e:2x2
jax: 0.10.0
libtpu: 0.0.40
codegen_flags: <defaults>
</compile_context>

<pallas_src>
import functools

import jax
import jax.numpy as jnp
from jax.experimental import pallas as pl
from jax.experimental.pallas import tpu as pltpu


def _round_up(n, m):
    return ((n + m - 1) // m) * m


def _ffn_kernel(x_ref, w1_ref, b1_ref, w2_ref, b2_ref, gamma_ref, beta_ref,
                o_ref, acc_ref, *, eps):
    """Grid = (row_tiles, hid_tiles); hidden axis is a reduction ('arbitrary')."""
    k = pl.program_id(1)

    @pl.when(k == 0)
    def _():
        acc_ref[...] = jnp.zeros_like(acc_ref)

    # ---- w_1 chunk + ReLU (native-dtype MXU operands, f32 accumulate) ----
    x = x_ref[...]
    h = jnp.dot(x, w1_ref[...], preferred_element_type=jnp.float32)
    h = jnp.maximum(h + b1_ref[...].astype(jnp.float32), 0.0)      # F.relu

    # Down-cast the hidden activation so the second matmul stays on the native
    # (e.g. bf16) MXU path; accumulation stays f32 via preferred_element_type.
    h = h.astype(w2_ref.dtype)

    # ---- w_2 chunk, accumulated over the hidden (k) axis ----
    acc_ref[...] += jnp.dot(h, w2_ref[...], preferred_element_type=jnp.float32)

    # dropout1 / dropout2 are identity in eval mode.
    # TODO(synk): training-mode dropout (pltpu.prng_random_bits) not implemented.

    @pl.when(k == pl.num_programs(1) - 1)
    def _():
        # ---- bias + residual add (f32) ----
        y = acc_ref[...] + b2_ref[...].astype(jnp.float32) \
            + x_ref[...].astype(jnp.float32)
        # ---- LayerNorm over last dim (biased variance, torch semantics) ----
        mean = jnp.mean(y, axis=-1, keepdims=True)
        centered = y - mean
        var = jnp.mean(centered * centered, axis=-1, keepdims=True)
        inv = jax.lax.rsqrt(var + eps)
        out = centered * inv * gamma_ref[...].astype(jnp.float32) \
              + beta_ref[...].astype(jnp.float32)
        o_ref[...] = out.astype(o_ref.dtype)


def _pick_hid_tile(d_hid, max_tile=1024):
    """Largest 128-multiple divisor of d_hid that is <= max_tile (else whole)."""
    if d_hid <= max_tile or d_hid % 128 != 0:
        return d_hid
    for cand in range(max_tile, 127, -128):
        if d_hid % cand == 0:
            return cand
    return d_hid


def _vmem_estimate(tm, th, d_in, dtype_bytes):
    dbl = 2  # double-buffered pipeline stages
    b = 0
    b += dbl * tm * d_in * dtype_bytes          # x tiles
    b += dbl * d_in * th * dtype_bytes          # w1 tiles
    b += dbl * th * dtype_bytes                 # b1 tiles
    b += dbl * th * d_in * dtype_bytes          # w2 tiles
    b += dbl * 3 * d_in * dtype_bytes           # b2, gamma, beta
    b += dbl * tm * d_in * dtype_bytes          # out tiles
    b += tm * d_in * 4                          # f32 accumulator scratch
    b += tm * th * (4 + dtype_bytes)            # hidden intermediate (f32 + cast)
    return b


def positionwise_feed_forward(x, w1, b1, w2, b2, gamma, beta,
                              *, eps=1e-6, tile_rows=256):
    """x: (batch, seq, d_in) -> (batch, seq, d_in).  Weights stored (in, out)."""
    batch, seq, d_in = x.shape
    d_hid = w1.shape[1]
    rows = batch * seq

    # Row tile: multiple of 8 (sublane), default 256 to fill the MXU; shrink to
    # the (8-rounded) row count for small inputs so the demo doesn't over-pad.
    tile_rows = _round_up(max(tile_rows, 8), 8)
    tm = min(tile_rows, _round_up(rows, 8))
    padded_rows = _round_up(rows, tm)

    # Hidden tile: bounds weight residency (v7x 64 MiB VMEM) for large d_hid;
    # whole d_hid when small / not 128-aligned.
    th = _pick_hid_tile(d_hid)

    x2d = x.reshape(rows, d_in)
    if padded_rows != rows:
        x2d = jnp.pad(x2d, ((0, padded_rows - rows), (0, 0)))

    # Keep params 2-D so the kernel sees lane-aligned (1, N) / (K, N) tiles.
    b1_2d = b1.reshape(1, d_hid)
    b2_2d = b2.reshape(1, d_in)
    gamma_2d = gamma.reshape(1, d_in)
    beta_2d = beta.reshape(1, d_in)

    kernel = functools.partial(_ffn_kernel, eps=eps)

    dtype_bytes = jnp.dtype(x.dtype).itemsize
    vmem_limit = int(min(64 * 1024 * 1024,
                         max(32 * 1024 * 1024,
                             1.3 * _vmem_estimate(tm, th, d_in, dtype_bytes))))

    grid = (padded_rows // tm, d_hid // th)

    out2d = pl.pallas_call(
        kernel,
        out_shape=jax.ShapeDtypeStruct((padded_rows, d_in), x.dtype),
        grid_spec=pltpu.PrefetchScalarGridSpec(
            num_scalar_prefetch=0,
            grid=grid,
            in_specs=[
                pl.BlockSpec((tm, d_in), lambda i, k: (i, 0)),    # x tile
                pl.BlockSpec((d_in, th), lambda i, k: (0, k)),    # w1 chunk
                pl.BlockSpec((1, th), lambda i, k: (0, k)),       # b1 chunk
                pl.BlockSpec((th, d_in), lambda i, k: (k, 0)),    # w2 chunk
                pl.BlockSpec((1, d_in), lambda i, k: (0, 0)),     # b2
                pl.BlockSpec((1, d_in), lambda i, k: (0, 0)),     # gamma
                pl.BlockSpec((1, d_in), lambda i, k: (0, 0)),     # beta
            ],
            out_specs=pl.BlockSpec((tm, d_in), lambda i, k: (i, 0)),
            scratch_shapes=[pltpu.VMEM((tm, d_in), jnp.float32)],
        ),
        compiler_params=pltpu.CompilerParams(
            dimension_semantics=("parallel", "arbitrary"),
            vmem_limit_bytes=vmem_limit),
    )(x2d, w1, b1_2d, w2, b2_2d, gamma_2d, beta_2d)

    if padded_rows != rows:
        out2d = out2d[:rows]
    return out2d.reshape(batch, seq, d_in)


def _reference(x, w1, b1, w2, b2, gamma, beta, eps=1e-6):
    xf = x.astype(jnp.float32)
    h = jnp.maximum(xf @ w1.astype(jnp.float32) + b1, 0.0)
    y = h @ w2.astype(jnp.float32) + b2 + xf
    mean = jnp.mean(y, axis=-1, keepdims=True)
    var = jnp.mean((y - mean) ** 2, axis=-1, keepdims=True)
    return ((y - mean) * jax.lax.rsqrt(var + eps) * gamma + beta).astype(x.dtype)


if __name__ == "__main__":
    key = jax.random.PRNGKey(0)
    batch, seq, d_in, d_hid = 2, 8, 32, 64

    k_x, k_w1, k_b1, k_w2, k_b2 = jax.random.split(key, 5)
    x = jax.random.normal(k_x, (batch, seq, d_in), dtype=jnp.float32)

    # Deterministic synthetic parameters (shapes from nn.Linear / nn.LayerNorm).
    # Weights stored as (in_features, out_features), i.e. W.T of torch Linear.
    w1 = jax.random.normal(k_w1, (d_in, d_hid), dtype=jnp.float32) * 0.05
    b1 = jax.random.normal(k_b1, (d_hid,), dtype=jnp.float32) * 0.05
    w2 = jax.random.normal(k_w2, (d_hid, d_in), dtype=jnp.float32) * 0.05
    b2 = jax.random.normal(k_b2, (d_in,), dtype=jnp.float32) * 0.05
    gamma = jnp.ones((d_in,), dtype=jnp.float32)
    beta = jnp.zeros((d_in,), dtype=jnp.float32)

    out = positionwise_feed_forward(x, w1, b1, w2, b2, gamma, beta)
    out = jax.block_until_ready(out)

    ref = _reference(x, w1, b1, w2, b2, gamma, beta)
    assert out.shape == x.shape
    assert jnp.allclose(out, ref, atol=1e-4, rtol=1e-4), "mismatch vs reference"

    print("KERNEL_OK")
</pallas_src>

<mosaic_0001>
module attributes {stable_mosaic.version = 11 : i64} {
  func.func @_ffn_kernel(%arg0: i32, %arg1: i32, %arg2: memref<16x32xf32, #tpu.memory_space<vmem>>, %arg3: memref<32x64xf32, #tpu.memory_space<vmem>>, %arg4: memref<1x64xf32, #tpu.memory_space<vmem>>, %arg5: memref<64x32xf32, #tpu.memory_space<vmem>>, %arg6: memref<1x32xf32, #tpu.memory_space<vmem>>, %arg7: memref<1x32xf32, #tpu.memory_space<vmem>>, %arg8: memref<1x32xf32, #tpu.memory_space<vmem>>, %arg9: memref<16x32xf32, #tpu.memory_space<vmem>>, %arg10: memref<16x32xf32, #tpu.memory_space<vmem>>) attributes {dimension_semantics = [#tpu.dimension_semantics<parallel>, #tpu.dimension_semantics<arbitrary>], iteration_bounds = array<i64: 1, 1>, scalar_prefetch = 0 : i64, scratch_operands = 1 : i64, tpu.core_type = #tpu.core_type<tc>, window_params = [{transform_indices = @transform_0, window_bounds = array<i64: 16, 32>}, {transform_indices = @transform_1, window_bounds = array<i64: 32, 64>}, {transform_indices = @transform_2, window_bounds = array<i64: 1, 64>}, {transform_indices = @transform_3, window_bounds = array<i64: 64, 32>}, {pipeline_mode = #tpu.pipeline_mode<synchronous>, transform_indices = @transform_4, window_bounds = array<i64: 1, 32>}, {pipeline_mode = #tpu.pipeline_mode<synchronous>, transform_indices = @transform_5, window_bounds = array<i64: 1, 32>}, {pipeline_mode = #tpu.pipeline_mode<synchronous>, transform_indices = @transform_6, window_bounds = array<i64: 1, 32>}, {transform_indices = @transform_7, window_bounds = array<i64: 16, 32>}]} {
    %c0_i32 = arith.constant 0 : i32
    %0 = arith.cmpi eq, %arg1, %c0_i32 : i32
    %1 = arith.extui %0 : i1 to i32
    %c0_i32_0 = arith.constant 0 : i32
    %2 = arith.cmpi ne, %1, %c0_i32_0 : i32
    scf.if %2 {
      %cst_16 = arith.constant 0.000000e+00 : f32
      %19 = vector.broadcast %cst_16 : f32 to vector<16x32xf32>
      %c0_17 = arith.constant 0 : index
      %c0_18 = arith.constant 0 : index
      %20 = vector.load %arg10[%c0_17, %c0_18] : memref<16x32xf32, #tpu.memory_space<vmem>>, vector<16x32xf32>
      tpu.vector_store %arg10[%c0_17, %c0_18], %19 {strides = array<i32>} : memref<16x32xf32, #tpu.memory_space<vmem>>, vector<16x32xf32>,
    } else {
    }
    %c0 = arith.constant 0 : index
    %c0_1 = arith.constant 0 : index
    %3 = vector.load %arg2[%c0, %c0_1] : memref<16x32xf32, #tpu.memory_space<vmem>>, vector<16x32xf32>
    %c0_2 = arith.constant 0 : index
    %c0_3 = arith.constant 0 : index
    %4 = vector.load %arg3[%c0_2, %c0_3] : memref<32x64xf32, #tpu.memory_space<vmem>>, vector<32x64xf32>
    %cst = arith.constant dense<0.000000e+00> : vector<16x64xf32>
    %5 = tpu.matmul %3, %4, %cst {dimension_numbers = #tpu.dot_dimension_numbers<[1], [0], [0], [1], [0, 0, 1, 1], [], []>} : vector<16x32xf32>, vector<32x64xf32>, vector<16x64xf32> -> vector<16x64xf32>
    %c0_4 = arith.constant 0 : index
    %c0_5 = arith.constant 0 : index
    %6 = vector.load %arg4[%c0_4, %c0_5] : memref<1x64xf32, #tpu.memory_space<vmem>>, vector<1x64xf32>
    %7 = vector.broadcast %6 : vector<1x64xf32> to vector<16x64xf32>
    %8 = arith.addf %5, %7 : vector<16x64xf32>
    %cst_6 = arith.constant 0.000000e+00 : f32
    %9 = vector.broadcast %cst_6 : f32 to vector<16x64xf32>
    %10 = arith.maximumf %8, %9 : vector<16x64xf32>
    %c0_7 = arith.constant 0 : index
    %c0_8 = arith.constant 0 : index
    %11 = vector.load %arg10[%c0_7, %c0_8] : memref<16x32xf32, #tpu.memory_space<vmem>>, vector<16x32xf32>
    %c0_9 = arith.constant 0 : index
    %c0_10 = arith.constant 0 : index
    %12 = vector.load %arg5[%c0_9, %c0_10] : memref<64x32xf32, #tpu.memory_space<vmem>>, vector<64x32xf32>
    %cst_11 = arith.constant dense<0.000000e+00> : vector<16x32xf32>
    %13 = tpu.matmul %10, %12, %cst_11 {dimension_numbers = #tpu.dot_dimension_numbers<[1], [0], [0], [1], [0, 0, 1, 1], [], []>} : vector<16x64xf32>, vector<64x32xf32>, vector<16x32xf32> -> vector<16x32xf32>
    %14 = arith.addf %11, %13 : vector<16x32xf32>
    %c0_12 = arith.constant 0 : index
    %c0_13 = arith.constant 0 : index
    %15 = vector.load %arg10[%c0_12, %c0_13] : memref<16x32xf32, #tpu.memory_space<vmem>>, vector<16x32xf32>
    tpu.vector_store %arg10[%c0_12, %c0_13], %14 {strides = array<i32>} : memref<16x32xf32, #tpu.memory_space<vmem>>, vector<16x32xf32>,
    %c0_i32_14 = arith.constant 0 : i32
    %16 = arith.cmpi eq, %arg1, %c0_i32_14 : i32
    %17 = arith.extui %16 : i1 to i32
    %c0_i32_15 = arith.constant 0 : i32
    %18 = arith.cmpi ne, %17, %c0_i32_15 : i32
    scf.if %18 {
      %c0_16 = arith.constant 0 : index
      %c0_17 = arith.constant 0 : index
      %19 = vector.load %arg10[%c0_16, %c0_17] : memref<16x32xf32, #tpu.memory_space<vmem>>, vector<16x32xf32>
      %c0_18 = arith.constant 0 : index
      %c0_19 = arith.constant 0 : index
      %20 = vector.load %arg6[%c0_18, %c0_19] : memref<1x32xf32, #tpu.memory_space<vmem>>, vector<1x32xf32>
      %21 = vector.broadcast %20 : vector<1x32xf32> to vector<16x32xf32>
      %22 = arith.addf %19, %21 : vector<16x32xf32>
      %c0_20 = arith.constant 0 : index
      %c0_21 = arith.constant 0 : index
      %23 = vector.load %arg2[%c0_20, %c0_21] : memref<16x32xf32, #tpu.memory_space<vmem>>, vector<16x32xf32>
      %24 = arith.addf %22, %23 : vector<16x32xf32>
      %cst_22 = arith.constant dense<0.000000e+00> : vector<16xf32>
      %25 = vector.multi_reduction <add>, %24, %cst_22 [1] : vector<16x32xf32> to vector<16xf32>
      %26 = vector.shape_cast %25 : vector<16xf32> to vector<16x1xf32>
      %cst_23 = arith.constant 3.200000e+01 : f32
      %27 = vector.broadcast %cst_23 : f32 to vector<16x1xf32>
      %28 = arith.divf %26, %27 : vector<16x1xf32>
      %29 = vector.broadcast %28 : vector<16x1xf32> to vector<16x32xf32>
      %30 = arith.subf %24, %29 : vector<16x32xf32>
      %31 = arith.mulf %30, %30 : vector<16x32xf32>
      %cst_24 = arith.constant dense<0.000000e+00> : vector<16xf32>
      %32 = vector.multi_reduction <add>, %31, %cst_24 [1] : vector<16x32xf32> to vector<16xf32>
      %33 = vector.shape_cast %32 : vector<16xf32> to vector<16x1xf32>
      %cst_25 = arith.constant 3.200000e+01 : f32
      %34 = vector.broadcast %cst_25 : f32 to vector<16x1xf32>
      %35 = arith.divf %33, %34 : vector<16x1xf32>
      %cst_26 = arith.constant 9.99999997E-7 : f32
      %36 = vector.broadcast %cst_26 : f32 to vector<16x1xf32>
      %37 = arith.addf %35, %36 : vector<16x1xf32>
      %38 = math.rsqrt %37 : vector<16x1xf32>
      %39 = vector.broadcast %38 : vector<16x1xf32> to vector<16x32xf32>
      %40 = arith.mulf %30, %39 : vector<16x32xf32>
      %c0_27 = arith.constant 0 : index
      %c0_28 = arith.constant 0 : index
      %41 = vector.load %arg7[%c0_27, %c0_28] : memref<1x32xf32, #tpu.memory_space<vmem>>, vector<1x32xf32>
      %42 = vector.broadcast %41 : vector<1x32xf32> to vector<16x32xf32>
      %43 = arith.mulf %40, %42 : vector<16x32xf32>
      %c0_29 = arith.constant 0 : index
      %c0_30 = arith.constant 0 : index
      %44 = vector.load %arg8[%c0_29, %c0_30] : memref<1x32xf32, #tpu.memory_space<vmem>>, vector<1x32xf32>
      %45 = vector.broadcast %44 : vector<1x32xf32> to vector<16x32xf32>
      %46 = arith.addf %43, %45 : vector<16x32xf32>
      %c0_31 = arith.constant 0 : index
      %c0_32 = arith.constant 0 : index
      %47 = vector.load %arg9[%c0_31, %c0_32] : memref<16x32xf32, #tpu.memory_space<vmem>>, vector<16x32xf32>
      tpu.vector_store %arg9[%c0_31, %c0_32], %46 {strides = array<i32>} : memref<16x32xf32, #tpu.memory_space<vmem>>, vector<16x32xf32>,
    } else {
    }
    return
  }
  func.func @transform_0(%arg0: i32, %arg1: i32) -> (i32, i32) {
    %c0_i32 = arith.constant 0 : i32
    %c0_i32_0 = arith.constant 0 : i32
    return %arg0, %c0_i32 : i32, i32
  }
  func.func @transform_1(%arg0: i32, %arg1: i32) -> (i32, i32) {
    %c0_i32 = arith.constant 0 : i32
    %c0_i32_0 = arith.constant 0 : i32
    return %c0_i32, %arg1 : i32, i32
  }
  func.func @transform_2(%arg0: i32, %arg1: i32) -> (i32, i32) {
    %c0_i32 = arith.constant 0 : i32
    %c0_i32_0 = arith.constant 0 : i32
    return %c0_i32, %arg1 : i32, i32
  }
  func.func @transform_3(%arg0: i32, %arg1: i32) -> (i32, i32) {
    %c0_i32 = arith.constant 0 : i32
    %c0_i32_0 = arith.constant 0 : i32
    return %arg1, %c0_i32 : i32, i32
  }
  func.func @transform_4(%arg0: i32, %arg1: i32) -> (i32, i32) {
    %c0_i32 = arith.constant 0 : i32
    %c0_i32_0 = arith.constant 0 : i32
    %c0_i32_1 = arith.constant 0 : i32
    return %c0_i32, %c0_i32_0 : i32, i32
  }
  func.func @transform_5(%arg0: i32, %arg1: i32) -> (i32, i32) {
    %c0_i32 = arith.constant 0 : i32
    %c0_i32_0 = arith.constant 0 : i32
    %c0_i32_1 = arith.constant 0 : i32
    return %c0_i32, %c0_i32_0 : i32, i32
  }
  func.func @transform_6(%arg0: i32, %arg1: i32) -> (i32, i32) {
    %c0_i32 = arith.constant 0 : i32
    %c0_i32_0 = arith.constant 0 : i32
    %c0_i32_1 = arith.constant 0 : i32
    return %c0_i32, %c0_i32_0 : i32, i32
  }
  func.func @transform_7(%arg0: i32, %arg1: i32) -> (i32, i32) {
    %c0_i32 = arith.constant 0 : i32
    %c0_i32_0 = arith.constant 0 : i32
    return %arg0, %c0_i32 : i32, i32
  }
}

</mosaic_0001>

<llo_original>
// kernel: tpu_custom_call.1
$region0: #{tpu_custom_call.1}
  #allocation0 [shape = 'u32[]', space=smem, size = 0x4, offset = 0x4, fixed_abs, tag = 'smem constant byte address 0x4 - core index']
  #allocation1 [shape = 'u32[72,128]{1,0:T(1,128)}', space=vmem, size = 0x9000, scoped, tag = 'internal scratch']
  #allocation2 [shape = 'f32[16,32]{1,0:T(8,128)}', space=vmem, size = 0x2000, scoped, tag = 'scratch operand']
  %s0 = inlined_call_operand.vmem [shape: f32[16,32], index: 0, kind: input, shape index: {}]
  %s1 = inlined_call_operand.vmem [shape: f32[32,64], index: 1, kind: input, shape index: {}]
  %s2 = inlined_call_operand.vmem [shape: f32[1,64], index: 2, kind: input, shape index: {}]
  %s3 = inlined_call_operand.vmem [shape: f32[64,32], index: 3, kind: input, shape index: {}]
  %s4 = inlined_call_operand.vmem [shape: f32[1,32], index: 4, kind: input, shape index: {}]
  %s5 = inlined_call_operand.vmem [shape: f32[1,32], index: 5, kind: input, shape index: {}]
  %s6 = inlined_call_operand.vmem [shape: f32[1,32], index: 6, kind: input, shape index: {}]
  %s7 = inlined_call_operand.hbm [shape: f32[16,32], index: 7, kind: output, shape index: {}]
  %s8 = sld [smem:[#allocation0]]
  $region46: #{tpu_custom_call.1} parent=0
    _
  %s10 = ssub.s32 1, %s8
  %s11 = scalar_select 0, %s10, %s8
  $region1: #{tpu_custom_call.1} parent=0
    #allocation3 [shape = 'u8[8192]{0}', space=vmem, size = 0x2000, scoped, tag = 'output window, operand 0, single buffered']
    #allocation4 [shape = 's32[1]{0}', space=sflag, size = 0x4, scoped, tag = 'scoped memory for tpu_custom_call.1']
    %12 = vsyncpa [#allocation4], 0
    // Predicated region
    $region2: #{tpu_custom_call.1} parent=1 // pred_check
      _
    $region3: #{tpu_custom_call.1} parent=1 // pred_check_branch
      %14 = sbr.rel (0) target = $region5
    $region4: #{tpu_custom_call.1} parent=1 // pred_region
      _
    $region5: #{tpu_custom_call.1} parent=1 // pred_fallthru
      _
    // Predicated region
    $region6: #{tpu_custom_call.1} parent=1 // pred_check
      _
    $region7: #{tpu_custom_call.1} parent=1 // pred_check_branch
      %16 = sbr.rel (0) target = $region9
    $region8: #{tpu_custom_call.1} parent=1 // pred_region
      _
    $region9: #{tpu_custom_call.1} parent=1 // pred_fallthru
      _
    // Predicated region
    $region10: #{tpu_custom_call.1} parent=1 // pred_check
      _
    $region11: #{tpu_custom_call.1} parent=1 // pred_check_branch
      %18 = sbr.rel (0) target = $region13
    $region12: #{tpu_custom_call.1} parent=1 // pred_region
      _
    $region13: #{tpu_custom_call.1} parent=1 // pred_fallthru
      _
    // Predicated region
    $region14: #{tpu_custom_call.1} parent=1 // pred_check
      _
    $region15: #{tpu_custom_call.1} parent=1 // pred_check_branch
      %20 = sbr.rel (0) target = $region17
    $region16: #{tpu_custom_call.1} parent=1 // pred_region
      _
    $region17: #{tpu_custom_call.1} parent=1 // pred_fallthru
      _
    // Predicated region
    $region18: #{tpu_custom_call.1} parent=1 // pred_check
      _
    $region19: #{tpu_custom_call.1} parent=1 // pred_check_branch
      %22 = sbr.rel (0) target = $region21
    $region20: #{tpu_custom_call.1} parent=1 // pred_region
      _
    $region21: #{tpu_custom_call.1} parent=1 // pred_fallthru
      _
    // Predicated region
    $region22: #{tpu_custom_call.1} parent=1 // pred_check
      _
    $region23: #{tpu_custom_call.1} parent=1 // pred_check_branch
      %24 = sbr.rel (0) target = $region25
    $region24: #{tpu_custom_call.1} parent=1 // pred_region
      _
    $region25: #{tpu_custom_call.1} parent=1 // pred_fallthru
      _
    // Predicated region
    $region26: #{tpu_custom_call.1} parent=1 // pred_check
      _
    $region27: #{tpu_custom_call.1} parent=1 // pred_check_branch
      %26 = sbr.rel (0) target = $region29
    $region28: #{tpu_custom_call.1} parent=1 // pred_region
      _
    $region29: #{tpu_custom_call.1} parent=1 // pred_fallthru
      _
    %p27 = scmp.eq.s32.totalorder 0, 0
    // Predicated region
    $region30: #{tpu_custom_call.1} parent=1 // pred_check
      %p28 = pneg %p27
    $region31: #{tpu_custom_call.1} parent=1 // pred_check_branch
      %30 = sbr.rel (%p28) target = $region33
    $region32: #{tpu_custom_call.1} parent=1 // pred_region
      %vm31 = vcmask 261120
      %32 = vst.msk [vmem:[#allocation2] sm:$0xff] %vm31, 0.0
      %33 = vst.msk [vmem:[#allocation2 + $0x8] sm:$0xff] %vm31, 0.0
    $region33: #{tpu_custom_call.1} parent=1 // pred_fallthru
      _
    %v34 = vld [vmem:[%s0] sm:$0xff]
    %v35 = vld [vmem:[%s0 + $0x8] sm:$0xff]
    %v36 = vld [vmem:[%s1] sm:$0xff]
    %v37 = vld [vmem:[%s1 + $0x8] sm:$0xff]
    %v38 = vld [vmem:[%s1 + $0x10] sm:$0xff]
    %v39 = vld [vmem:[%s1 + $0x18] sm:$0xff]
    %v40 = vld [vmem:[%s2] sm:$0x1]
    %v42 = vperm.slane %v40, 0
    %vm44 = vcmask 261120
    %v46 = vsel %vm44, %v34, 0
    %v49 = vsel %vm44, %v35, 0
    %51 = vmatpush.msra.mxu0 0.0
    %52 = vmatpush.msra.mxu0 0.0
    %53 = vmatpush.msra.mxu0 0.0
    %54 = vmatpush.msra.mxu0 0.0
    %55 = vmatpush.msra.mxu0 0.0
    %56 = vmatpush.msra.mxu0 0.0
    %57 = vmatpush.msra.mxu0 0.0
    %58 = vmatpush.msra.mxu0 0.0
    %59 = vmatpush.msra.mxu0 0.0
    %60 = vmatpush.msra.mxu0 0.0
    %61 = vmatpush.msra.mxu0 0.0
    %62 = vmatpush.msra.mxu0 0.0
    %63 = vmatpush.msra.mxu0 %v39
    %64 = vmatpush.msra.mxu0 %v38
    %65 = vmatpush.msra.mxu0 %v37
    %66 = vmatpush.msra.mxu0 %v36
    %67 = vmatmul.f32.gmra.mxu0 %v46
    %v68 = vpop.f32.mrf.mxu0
    %v69 = vadd.f32 %v42, %v68
    %70 = vmatmul.f32.gmra.mxu0 %v49
    %v71 = vpop.f32.mrf.mxu0
    %v72 = vadd.f32 %v42, %v71
    %73 = vdwg.mxu0
    %v74 = vmax.f32 %v69, 0.0
    %v75 = vmax.f32 %v72, 0.0
    %v76 = vld [vmem:[#allocation2] sm:$0xff]
    %v77 = vld [vmem:[#allocation2 + $0x8] sm:$0xff]
    %v78 = vld [vmem:[%s3] sm:$0xff]
    %v79 = vld [vmem:[%s3 + $0x8] sm:$0xff]
    %v80 = vld [vmem:[%s3 + $0x10] sm:$0xff]
    %v81 = vld [vmem:[%s3 + $0x18] sm:$0xff]
    %v82 = vld [vmem:[%s3 + $0x20] sm:$0xff]
    %v83 = vld [vmem:[%s3 + $0x28] sm:$0xff]
    %v84 = vld [vmem:[%s3 + $0x30] sm:$0xff]
    %v85 = vld [vmem:[%s3 + $0x38] sm:$0xff]
    %vm86 = vcmask 523264
    %v88 = vsel %vm86, %v74, 0
    %v91 = vsel %vm86, %v75, 0
    %93 = vmatpush.msra.mxu0 0.0
    %94 = vmatpush.msra.mxu0 0.0
    %95 = vmatpush.msra.mxu0 0.0
    %96 = vmatpush.msra.mxu0 0.0
    %97 = vmatpush.msra.mxu0 0.0
    %98 = vmatpush.msra.mxu0 0.0
    %99 = vmatpush.msra.mxu0 0.0
    %100 = vmatpush.msra.mxu0 0.0
    %101 = vmatpush.msra.mxu0 %v85
    %102 = vmatpush.msra.mxu0 %v84
    %103 = vmatpush.msra.mxu0 %v83
    %104 = vmatpush.msra.mxu0 %v82
    %105 = vmatpush.msra.mxu0 %v81
    %106 = vmatpush.msra.mxu0 %v80
    %107 = vmatpush.msra.mxu0 %v79
    %108 = vmatpush.msra.mxu0 %v78
    %109 = vmatmul.f32.gmra.mxu0 %v88
    %v110 = vpop.f32.mrf.mxu0
    %v111 = vadd.f32 0.0, %v110
    %112 = vmatmul.f32.gmra.mxu0 %v91
    %v113 = vpop.f32.mrf.mxu0
    %v114 = vadd.f32 0.0, %v113
    %115 = vdwg.mxu0
    %v116 = vadd.f32 %v76, %v111
    %v117 = vadd.f32 %v77, %v114
    %118 = vst.msk [vmem:[#allocation2] sm:$0xff] %vm44, %v116
    %119 = vst.msk [vmem:[#allocation2 + $0x8] sm:$0xff] %vm44, %v117
    // Predicated region
    $region34: #{tpu_custom_call.1} parent=1 // pred_check
      %p120 = pneg %p27
    $region35: #{tpu_custom_call.1} parent=1 // pred_check_branch
      %122 = sbr.rel (%p120) target = $region37
    $region36: #{tpu_custom_call.1} parent=1 // pred_region
      %v123 = vld [vmem:[#allocation2] sm:$0xff]
      %v124 = vld [vmem:[#allocation2 + $0x8] sm:$0xff]
      %v125 = vld [vmem:[%s4] sm:$0x1]
      %v127 = vperm.slane %v125, 0
      %v129 = vadd.f32 %v123, %v127
      %v130 = vadd.f32 %v124, %v127
      %v131 = vld [vmem:[%s0] sm:$0xff]
      %v132 = vld [vmem:[%s0 + $0x8] sm:$0xff]
      %v133 = vadd.f32 %v129, %v131
      %v134 = vadd.f32 %v130, %v132
      %v135 = vsel %vm44, %v133, 0.0
      %136 = vadd.xlane.f32.xlu0 %v135
      %v137 = vpop.xlane.xlu0 %136
      %v138 = vsel %vm44, %v134, 0.0
      %139 = vadd.xlane.f32.xlu0 %v138
      %v140 = vpop.xlane.xlu0 %139
      %v141 = vrcp.pop 32.0
      %v142 = vmul.f32 32.0, %v141
      %v143 = vsub.f32 1.0, %v142
      %v144 = vmul.f32 %v141, %v143
      %v145 = vadd.f32 %v141, %v144
      %vm146 = vweird.f32 %v141
      %v147 = vsel %vm146, %v141, %v145
      %v148 = vmul.f32 %v137, %v147
      %v149 = vmul.f32 %v140, %v147
      %v150 = vsub.f32 %v133, %v148
      %v151 = vsub.f32 %v134, %v149
      %v152 = vmul.f32 %v150, %v150
      %v153 = vmul.f32 %v151, %v151
      %v154 = vsel %vm44, %v152, 0.0
      %155 = vadd.xlane.f32.xlu0 %v154
      %v156 = vpop.xlane.xlu0 %155
      %v157 = vsel %vm44, %v153, 0.0
      %158 = vadd.xlane.f32.xlu0 %v157
      %v159 = vpop.xlane.xlu0 %158
      %v160 = vmul.f32 %v156, %v147
      %v161 = vmul.f32 %v159, %v147
      %v162 = vadd.f32 %v160, 1e-06
      %v163 = vadd.f32 %v161, 1e-06
      %v164 = vrsqrt.pop %v162
      %v165 = vmul.f32 %v164, %v162
      %v166 = vmul.f32 %v165, %v164
      %v167 = vmul.f32 0.5, %v166
      %v168 = vsub.f32 1.5, %v167
      %v169 = vmul.f32 %v164, %v168
      %vm170 = vweird.f32 %v162
      %vm171 = vweird.f32 %v164
      %vm172 = vmor %vm170, %vm171
      %v173 = vsel %vm172, %v164, %v169
      %v174 = vrsqrt.pop %v163
      %v175 = vmul.f32 %v174, %v163
      %v176 = vmul.f32 %v175, %v174
      %v177 = vmul.f32 0.5, %v176
      %v178 = vsub.f32 1.5, %v177
      %v179 = vmul.f32 %v174, %v178
      %vm180 = vweird.f32 %v163
      %vm181 = vweird.f32 %v174
      %vm182 = vmor %vm180, %vm181
      %v183 = vsel %vm182, %v174, %v179
      %v184 = vmul.f32 %v150, %v173
      %v185 = vmul.f32 %v151, %v183
      %v186 = vld [vmem:[%s5] sm:$0x1]
      %v188 = vperm.slane %v186, 0
      %v190 = vmul.f32 %v184, %v188
      %v191 = vmul.f32 %v185, %v188
      %v192 = vld [vmem:[%s6] sm:$0x1]
      %v194 = vperm.slane %v192, 0
      %v196 = vadd.f32 %v190, %v194
      %v197 = vadd.f32 %v191, %v194
      %198 = vst.msk [vmem:[#allocation3] sm:$0xff] %vm44, %v196
      %199 = vst.msk [vmem:[#allocation3 + $0x8] sm:$0xff] %vm44, %v197
    $region37: #{tpu_custom_call.1} parent=1 // pred_fallthru
      _
    // Predicated region
    $region38: #{tpu_custom_call.1} parent=1 // pred_check
      _
    $region39: #{tpu_custom_call.1} parent=1 // pred_check_branch
      %201 = sbr.rel (0) target = $region41
    $region40: #{tpu_custom_call.1} parent=1 // pred_region
      %203 = vsyncadd [#allocation4], 0
      %s204 = sshll.u32 [#allocation3], 4
      %s205 = int_to_ptr.vmem [resolvable:$true] %s204
      %s206 = sshll.u32 %s7, 4
      %s207 = int_to_ptr.hbm [resolvable:$true] %s206
      %212 = dma.vmem_to_hbm [thread:$0]  %s205, 256, %s207, [#allocation4], 128, 128, 8
    $region41: #{tpu_custom_call.1} parent=1 // pred_fallthru
      _
    // Predicated region
    $region42: #{tpu_custom_call.1} parent=1 // pred_check
      _
    $region43: #{tpu_custom_call.1} parent=1 // pred_check_branch
      %214 = sbr.rel (0) target = $region45
    $region44: #{tpu_custom_call.1} parent=1 // pred_region
      %216 = dma.done [#allocation4], 256
    $region45: #{tpu_custom_call.1} parent=1 // pred_fallthru
      _
    %217 = vsyncpa [#allocation4], 1

</llo_original>
